<compile_context>
chip_gen: v6e
topology: v6e:2x2x1
jax: 0.10.0
libtpu: 0.0.40
codegen_flags: <defaults>
</compile_context>

<pallas_src>
import functools

import jax
import jax.numpy as jnp
from jax import lax
from jax.experimental import pallas as pl
from jax.experimental.pallas import tpu as pltpu

_LANES = 128


def _elementwise_partial_sums(x, t, *, compute_dice):
    """Per-lane (1, 128) partial sums of bce [, p*t, p+t] for one f32 chunk."""
    # Stable BCE-with-logits keeping nn.BCELoss's -100 clamp:
    #   log(p)   = min(x,0) - log(1+e),  log(1-p) = -max(x,0) - log(1+e),
    # with e = exp(-|x|).  One exp + one log per element (both EUP).
    e = jnp.exp(-jnp.abs(x))
    log1pe = jnp.log(1.0 + e)          # e in (0,1]; log1p accuracy loss is <1e-7 abs
    log_p = jnp.maximum(jnp.minimum(x, 0.0) - log1pe, -100.0)
    log_1mp = jnp.maximum(-jnp.maximum(x, 0.0) - log1pe, -100.0)
    # -(t*log_p + (1-t)*log_1mp), rewritten to save VALU ops (v7x is VALU-bound).
    bce = -log_1mp - t * (log_p - log_1mp)
    sums = [jnp.sum(bce, axis=0, keepdims=True)]
    if compute_dice:
        # sigmoid(x); exact-divide replaced by an EUP approx reciprocal.
        p = jnp.where(x >= 0.0, 1.0, e) * pl.reciprocal(1.0 + e, approx=True)
        sums.append(jnp.sum(p * t, axis=0, keepdims=True))
        sums.append(jnp.sum(p + t, axis=0, keepdims=True))
    return tuple(sums)


def _dice_bce_kernel(o_ref, t_ref, *out_refs, compute_dice, chunk_rows,
                     num_chunks, needs_mask, rows_valid_last):
    # o_ref / t_ref: (r_tile, 128) block; out_refs: 1 or 3 refs of shape (1, 128).
    r_tile = o_ref.shape[0]
    if needs_mask:
        is_last = pl.program_id(1) == pl.num_programs(1) - 1
        limit = jnp.where(is_last, rows_valid_last, r_tile).astype(jnp.int32)

    def chunk_sums(x, t, row0):
        x = x.astype(jnp.float32)
        t = t.astype(jnp.float32)
        if needs_mask:
            rows = row0 + lax.broadcasted_iota(jnp.int32, x.shape, 0)
            valid = rows < limit
            # Invalid rows -> (logit=-100, target=0): contributes ~0 to all
            # three sums and scrubs any garbage (NaN/Inf) in the padded region.
            x = jnp.where(valid, x, -100.0)
            t = jnp.where(valid, t, 0.0)
        return _elementwise_partial_sums(x, t, compute_dice=compute_dice)

    if num_chunks == 1:
        totals = chunk_sums(o_ref[...], t_ref[...], 0)
    else:
        def body(c, carry):
            start = pl.multiple_of(c * chunk_rows, chunk_rows)
            s = chunk_sums(o_ref[pl.ds(start, chunk_rows), :],
                           t_ref[pl.ds(start, chunk_rows), :],
                           c * chunk_rows)
            return tuple(a + b for a, b in zip(carry, s))

        init = tuple(jnp.zeros((1, _LANES), jnp.float32)
                     for _ in range(3 if compute_dice else 1))
        totals = lax.fori_loop(0, num_chunks, body, init)

    for ref, val in zip(out_refs, totals):
        ref[...] = val


def dice_bce_loss(outputs, targets, *, bce_weight=0.5, mode="dice", eps=1e-7,
                  smooth=1.0, block_rows=8192, chunk_rows=512):
    """Pallas TPU equivalent of DiceBCELoss.forward; returns float32 of shape (B,).

    Perf notes:
      * Pass binary-mask targets (and, if acceptable, logits) as bfloat16 to cut
        HBM read traffic; the kernel upcasts to float32 internally.
      * bce_weight / mode / eps / smooth must be static Python values.
    """
    B = outputs.shape[0]
    o2 = outputs.reshape(B, -1)
    t2 = targets.reshape(B, -1)
    N = o2.shape[1]

    # Only pad up to the 128-lane boundary (rare for image tensors, at most 127
    # elements).  The block-level ragged row tail is masked in-kernel instead of
    # materializing padded copies of the full inputs in HBM.
    lane_pad = (-N) % _LANES
    if lane_pad:
        o2 = jnp.pad(o2, ((0, 0), (0, lane_pad)), constant_values=-100.0)
        t2 = jnp.pad(t2, ((0, 0), (0, lane_pad)), constant_values=0.0)
    R = (N + lane_pad) // _LANES

    chunk_rows = max(8, int(chunk_rows))
    block_rows = max(chunk_rows, (int(block_rows) // chunk_rows) * chunk_rows)
    if R <= chunk_rows:
        r_tile, chunk, num_chunks, num_k = R, R, 1, 1
        rows_valid_last, needs_mask = R, False
    else:
        chunk = chunk_rows
        r_tile = min(block_rows, (R // chunk) * chunk)   # multiple of chunk, <= R
        num_chunks = r_tile // chunk
        num_k = (R + r_tile - 1) // r_tile
        rows_valid_last = R - (num_k - 1) * r_tile
        needs_mask = rows_valid_last != r_tile

    o3 = o2.reshape(B, R, _LANES)
    t3 = t2.reshape(B, R, _LANES)

    compute_dice = bce_weight < 1.0
    if compute_dice and mode not in ("dice", "jaccard"):
        raise ValueError(f"unknown mode: {mode}")
    n_out = 3 if compute_dice else 1

    kernel = functools.partial(
        _dice_bce_kernel, compute_dice=compute_dice, chunk_rows=chunk,
        num_chunks=num_chunks, needs_mask=needs_mask,
        rows_valid_last=rows_valid_last)

    in_spec = pl.BlockSpec((None, r_tile, _LANES), lambda b, k: (b, k, 0))
    out_spec = pl.BlockSpec((None, None, 1, _LANES), lambda b, k: (b, k, 0, 0))

    partials = pl.pallas_call(
        kernel,
        out_shape=tuple(jax.ShapeDtypeStruct((B, num_k, 1, _LANES), jnp.float32)
                        for _ in range(n_out)),
        grid=(B, num_k),
        in_specs=[in_spec, in_spec],
        out_specs=tuple(out_spec for _ in range(n_out)),
        compiler_params=pltpu.CompilerParams(
            dimension_semantics=("parallel", "parallel"),
            vmem_limit_bytes=48 * 1024 * 1024),
    )(o3, t3)

    # Tiny finalize in plain JAX: cross-lane / cross-block reduce + dice/log.
    bce_sum = jnp.sum(partials[0], axis=(1, 2, 3))
    loss = (bce_weight / N) * bce_sum
    if compute_dice:
        inter = jnp.sum(partials[1], axis=(1, 2, 3))
        union = jnp.sum(partials[2], axis=(1, 2, 3))
        if mode == "dice":
            score = (2.0 * inter + smooth) / (union + smooth + eps)
        else:  # jaccard
            score = inter / (union - inter + eps)
        loss = loss - (1.0 - bce_weight) * jnp.log(score)
    return loss


def _reference(outputs, targets, *, bce_weight=0.5, mode="dice", eps=1e-7,
               smooth=1.0):
    # Pure-JAX mirror of the PyTorch module (sigmoid + BCELoss with -100 clamp).
    B = outputs.shape[0]
    x = outputs.reshape(B, -1).astype(jnp.float32)
    t = targets.reshape(B, -1).astype(jnp.float32)
    p = jax.nn.sigmoid(x)
    bce = -(t * jnp.maximum(jnp.log(p), -100.0)
            + (1.0 - t) * jnp.maximum(jnp.log(1.0 - p), -100.0))
    loss = bce_weight * jnp.mean(bce, axis=1)
    if bce_weight < 1.0:
        inter = jnp.sum(p * t, axis=1)
        union = jnp.sum(p, axis=1) + jnp.sum(t, axis=1)
        if mode == "dice":
            score = (2.0 * inter + smooth) / (union + smooth + eps)
        else:
            score = inter / (union - inter + eps)
        loss = loss - (1.0 - bce_weight) * jnp.log(score)
    return loss


if __name__ == "__main__":
    key = jax.random.PRNGKey(0)
    k1, k2, k3, k4 = jax.random.split(key, 4)

    # Case 1: small NCHW input (batch=2, channels=4, 16x16); bf16 binary masks.
    logits1 = jax.random.normal(k1, (2, 4, 16, 16), dtype=jnp.float32)
    masks1 = jax.random.bernoulli(k2, 0.5, (2, 4, 16, 16)).astype(jnp.bfloat16)
    out1 = jax.block_until_ready(dice_bce_loss(logits1, masks1))
    ref1 = _reference(logits1, masks1)
    assert out1.shape == (2,)
    assert jnp.allclose(out1, ref1, rtol=2e-3, atol=2e-3), (out1, ref1)

    # Case 2: row count not a multiple of the block (exercises the in-kernel
    # ragged-tail mask and the inner chunk loop).
    logits2 = jax.random.normal(k3, (1, 4, 184, 184), dtype=jnp.float32)
    masks2 = jax.random.bernoulli(k4, 0.3, (1, 4, 184, 184)).astype(jnp.bfloat16)
    out2 = jax.block_until_ready(dice_bce_loss(logits2, masks2))
    ref2 = _reference(logits2, masks2)
    assert jnp.allclose(out2, ref2, rtol=2e-3, atol=2e-3), (out2, ref2)

    # Case 3: BCE-only configuration (dice path statically skipped in-kernel).
    out3 = jax.block_until_ready(dice_bce_loss(logits1, masks1, bce_weight=1.0))
    ref3 = _reference(logits1, masks1, bce_weight=1.0)
    assert jnp.allclose(out3, ref3, rtol=1e-3, atol=1e-3), (out3, ref3)

    print("KERNEL_OK")
</pallas_src>

<mosaic_0001>
module attributes {stable_mosaic.version = 11 : i64} {
  func.func @_dice_bce_kernel(%arg0: i32, %arg1: i32, %arg2: memref<1x8x128xf32, #tpu.memory_space<vmem>>, %arg3: memref<1x8x128xbf16, #tpu.memory_space<vmem>>, %arg4: memref<1x1x1x128xf32, #tpu.memory_space<vmem>>, %arg5: memref<1x1x1x128xf32, #tpu.memory_space<vmem>>, %arg6: memref<1x1x1x128xf32, #tpu.memory_space<vmem>>) attributes {dimension_semantics = [#tpu.dimension_semantics<parallel>, #tpu.dimension_semantics<parallel>], iteration_bounds = array<i64: 2, 1>, scalar_prefetch = 0 : i64, scratch_operands = 0 : i64, tpu.core_type = #tpu.core_type<tc>, window_params = [{transform_indices = @transform_0, window_bounds = array<i64: 1, 8, 128>}, {transform_indices = @transform_1, window_bounds = array<i64: 1, 8, 128>}, {transform_indices = @transform_2, window_bounds = array<i64: 1, 1, 1, 128>}, {transform_indices = @transform_3, window_bounds = array<i64: 1, 1, 1, 128>}, {transform_indices = @transform_4, window_bounds = array<i64: 1, 1, 1, 128>}]} {
    %c0 = arith.constant 0 : index
    %c0_0 = arith.constant 0 : index
    %c0_1 = arith.constant 0 : index
    %0 = vector.load %arg2[%c0, %c0_0, %c0_1] : memref<1x8x128xf32, #tpu.memory_space<vmem>>, vector<1x8x128xf32>
    %1 = vector.shape_cast %0 : vector<1x8x128xf32> to vector<8x128xf32>
    %c0_2 = arith.constant 0 : index
    %c0_3 = arith.constant 0 : index
    %c0_4 = arith.constant 0 : index
    %2 = vector.load %arg3[%c0_2, %c0_3, %c0_4] : memref<1x8x128xbf16, #tpu.memory_space<vmem>>, vector<1x8x128xbf16>
    %3 = vector.shape_cast %2 : vector<1x8x128xbf16> to vector<8x128xbf16>
    %4 = arith.extf %3 : vector<8x128xbf16> to vector<8x128xf32>
    %5 = math.absf %1 : vector<8x128xf32>
    %cst = arith.constant 0.000000e+00 : f32
    %6 = vector.broadcast %cst : f32 to vector<8x128xf32>
    %7 = arith.subf %6, %5 : vector<8x128xf32>
    %8 = math.exp %7 : vector<8x128xf32>
    %cst_5 = arith.constant 1.000000e+00 : f32
    %9 = vector.broadcast %cst_5 : f32 to vector<8x128xf32>
    %10 = arith.addf %9, %8 : vector<8x128xf32>
    %11 = math.log %10 : vector<8x128xf32>
    %cst_6 = arith.constant 0.000000e+00 : f32
    %12 = vector.broadcast %cst_6 : f32 to vector<8x128xf32>
    %13 = arith.minimumf %1, %12 : vector<8x128xf32>
    %14 = arith.subf %13, %11 : vector<8x128xf32>
    %cst_7 = arith.constant -1.000000e+02 : f32
    %15 = vector.broadcast %cst_7 : f32 to vector<8x128xf32>
    %16 = arith.maximumf %14, %15 : vector<8x128xf32>
    %cst_8 = arith.constant 0.000000e+00 : f32
    %17 = vector.broadcast %cst_8 : f32 to vector<8x128xf32>
    %18 = arith.maximumf %1, %17 : vector<8x128xf32>
    %cst_9 = arith.constant 0.000000e+00 : f32
    %19 = vector.broadcast %cst_9 : f32 to vector<8x128xf32>
    %20 = arith.subf %19, %18 : vector<8x128xf32>
    %21 = arith.subf %20, %11 : vector<8x128xf32>
    %cst_10 = arith.constant -1.000000e+02 : f32
    %22 = vector.broadcast %cst_10 : f32 to vector<8x128xf32>
    %23 = arith.maximumf %21, %22 : vector<8x128xf32>
    %cst_11 = arith.constant 0.000000e+00 : f32
    %24 = vector.broadcast %cst_11 : f32 to vector<8x128xf32>
    %25 = arith.subf %24, %23 : vector<8x128xf32>
    %26 = arith.subf %16, %23 : vector<8x128xf32>
    %27 = arith.mulf %4, %26 : vector<8x128xf32>
    %28 = arith.subf %25, %27 : vector<8x128xf32>
    %cst_12 = arith.constant dense<0.000000e+00> : vector<128xf32>
    %29 = vector.multi_reduction <add>, %28, %cst_12 [0] : vector<8x128xf32> to vector<128xf32>
    %30 = vector.shape_cast %29 : vector<128xf32> to vector<1x128xf32>
    %cst_13 = arith.constant 0.000000e+00 : f32
    %31 = vector.broadcast %cst_13 : f32 to vector<8x128xf32>
    %32 = arith.cmpf oge, %1, %31 : vector<8x128xf32>
    %cst_14 = arith.constant 1.000000e+00 : f32
    %33 = vector.broadcast %cst_14 : f32 to vector<8x128xf32>
    %34 = arith.select %32, %33, %8 : vector<8x128xi1>, vector<8x128xf32>
    %cst_15 = arith.constant 1.000000e+00 : f32
    %35 = vector.broadcast %cst_15 : f32 to vector<8x128xf32>
    %36 = arith.addf %35, %8 : vector<8x128xf32>
    %37 = tpu.reciprocal %36 {approx = true} : vector<8x128xf32> -> vector<8x128xf32>
    %38 = arith.mulf %34, %37 : vector<8x128xf32>
    %39 = arith.mulf %38, %4 : vector<8x128xf32>
    %cst_16 = arith.constant dense<0.000000e+00> : vector<128xf32>
    %40 = vector.multi_reduction <add>, %39, %cst_16 [0] : vector<8x128xf32> to vector<128xf32>
    %41 = vector.shape_cast %40 : vector<128xf32> to vector<1x128xf32>
    %42 = arith.addf %38, %4 : vector<8x128xf32>
    %cst_17 = arith.constant dense<0.000000e+00> : vector<128xf32>
    %43 = vector.multi_reduction <add>, %42, %cst_17 [0] : vector<8x128xf32> to vector<128xf32>
    %44 = vector.shape_cast %43 : vector<128xf32> to vector<1x128xf32>
    %c0_18 = arith.constant 0 : index
    %c0_19 = arith.constant 0 : index
    %c0_20 = arith.constant 0 : index
    %c0_21 = arith.constant 0 : index
    %45 = vector.load %arg4[%c0_18, %c0_19, %c0_20, %c0_21] : memref<1x1x1x128xf32, #tpu.memory_space<vmem>>, vector<1x1x1x128xf32>
    %46 = vector.shape_cast %45 : vector<1x1x1x128xf32> to vector<1x128xf32>
    %47 = vector.shape_cast %30 : vector<1x128xf32> to vector<1x1x1x128xf32>
    tpu.vector_store %arg4[%c0_18, %c0_19, %c0_20, %c0_21], %47 {strides = array<i32>} : memref<1x1x1x128xf32, #tpu.memory_space<vmem>>, vector<1x1x1x128xf32>,
    %c0_22 = arith.constant 0 : index
    %c0_23 = arith.constant 0 : index
    %c0_24 = arith.constant 0 : index
    %c0_25 = arith.constant 0 : index
    %48 = vector.load %arg5[%c0_22, %c0_23, %c0_24, %c0_25] : memref<1x1x1x128xf32, #tpu.memory_space<vmem>>, vector<1x1x1x128xf32>
    %49 = vector.shape_cast %48 : vector<1x1x1x128xf32> to vector<1x128xf32>
    %50 = vector.shape_cast %41 : vector<1x128xf32> to vector<1x1x1x128xf32>
    tpu.vector_store %arg5[%c0_22, %c0_23, %c0_24, %c0_25], %50 {strides = array<i32>} : memref<1x1x1x128xf32, #tpu.memory_space<vmem>>, vector<1x1x1x128xf32>,
    %c0_26 = arith.constant 0 : index
    %c0_27 = arith.constant 0 : index
    %c0_28 = arith.constant 0 : index
    %c0_29 = arith.constant 0 : index
    %51 = vector.load %arg6[%c0_26, %c0_27, %c0_28, %c0_29] : memref<1x1x1x128xf32, #tpu.memory_space<vmem>>, vector<1x1x1x128xf32>
    %52 = vector.shape_cast %51 : vector<1x1x1x128xf32> to vector<1x128xf32>
    %53 = vector.shape_cast %44 : vector<1x128xf32> to vector<1x1x1x128xf32>
    tpu.vector_store %arg6[%c0_26, %c0_27, %c0_28, %c0_29], %53 {strides = array<i32>} : memref<1x1x1x128xf32, #tpu.memory_space<vmem>>, vector<1x1x1x128xf32>,
    return
  }
  func.func @transform_0(%arg0: i32, %arg1: i32) -> (i32, i32, i32) {
    %c0_i32 = arith.constant 0 : i32
    %c0_i32_0 = arith.constant 0 : i32
    return %arg0, %arg1, %c0_i32 : i32, i32, i32
  }
  func.func @transform_1(%arg0: i32, %arg1: i32) -> (i32, i32, i32) {
    %c0_i32 = arith.constant 0 : i32
    %c0_i32_0 = arith.constant 0 : i32
    return %arg0, %arg1, %c0_i32 : i32, i32, i32
  }
  func.func @transform_2(%arg0: i32, %arg1: i32) -> (i32, i32, i32, i32) {
    %c0_i32 = arith.constant 0 : i32
    %c0_i32_0 = arith.constant 0 : i32
    %c0_i32_1 = arith.constant 0 : i32
    return %arg0, %arg1, %c0_i32, %c0_i32_0 : i32, i32, i32, i32
  }
  func.func @transform_3(%arg0: i32, %arg1: i32) -> (i32, i32, i32, i32) {
    %c0_i32 = arith.constant 0 : i32
    %c0_i32_0 = arith.constant 0 : i32
    %c0_i32_1 = arith.constant 0 : i32
    return %arg0, %arg1, %c0_i32, %c0_i32_0 : i32, i32, i32, i32
  }
  func.func @transform_4(%arg0: i32, %arg1: i32) -> (i32, i32, i32, i32) {
    %c0_i32 = arith.constant 0 : i32
    %c0_i32_0 = arith.constant 0 : i32
    %c0_i32_1 = arith.constant 0 : i32
    return %arg0, %arg1, %c0_i32, %c0_i32_0 : i32, i32, i32, i32
  }
}

</mosaic_0001>

<llo_original>
// kernel: tpu_custom_call.1
$region0: #{tpu_custom_call.1}
  #allocation0 [shape = 'u32[]', space=smem, size = 0x4, offset = 0x4, fixed_abs, tag = 'smem constant byte address 0x4 - core index']
  #allocation1 [shape = 'u32[144,128]{1,0:T(1,128)}', space=vmem, size = 0x12000, scoped, tag = 'internal scratch']
  %s0 = inlined_call_operand.hbm [shape: f32[2,8,128], index: 0, kind: input, shape index: {}]
  %s1 = inlined_call_operand.hbm [shape: bf16[2,8,128], index: 1, kind: input, shape index: {}]
  %s2 = inlined_call_operand.hbm [shape: f32[2,1,1,128], index: 2, kind: output, shape index: {0}]
  %s3 = inlined_call_operand.hbm [shape: f32[2,1,1,128], index: 3, kind: output, shape index: {1}]
  %s4 = inlined_call_operand.hbm [shape: f32[2,1,1,128], index: 4, kind: output, shape index: {2}]
  %5 = xla_tuple %s2, %s3, %s4
  %s6 = sld [smem:[#allocation0]]
  $region65: #{tpu_custom_call.1} parent=0
    _
  %s8 = ssub.s32 1, %s6
  %s9 = scalar_select 0, %s8, %s6
  $region1: #{tpu_custom_call.1} parent=0
    #allocation2 [shape = 'u8[8192]{0}', space=vmem, size = 0x2000, scoped, tag = 'input window, operand 0']
    #allocation3 [shape = 's32[2]{0}', space=sflag, size = 0x8, scoped, tag = 'scoped memory for tpu_custom_call.1']
    #allocation4 [shape = 's32[2]{0}', space=sflag, size = 0x8, scoped, tag = 'scoped memory for tpu_custom_call.1']
    #allocation5 [shape = 'u8[4096]{0}', space=vmem, size = 0x1000, scoped, tag = 'input window, operand 1']
    #allocation6 [shape = 's32[2]{0}', space=sflag, size = 0x8, scoped, tag = 'scoped memory for tpu_custom_call.1']
    #allocation7 [shape = 'u8[1024]{0}', space=vmem, size = 0x400, scoped, tag = 'output window, operand 0']
    #allocation8 [shape = 'u8[1024]{0}', space=vmem, size = 0x400, scoped, tag = 'output window, operand 1']
    #allocation9 [shape = 's32[2]{0}', space=sflag, size = 0x8, scoped, tag = 'scoped memory for tpu_custom_call.1']
    #allocation10 [shape = 'u8[1024]{0}', space=vmem, size = 0x400, scoped, tag = 'output window, operand 2']
    %10 = vsyncpa [#allocation3], 0
    %s11 = scalar_lea.sflag [#allocation3], 1
    %12 = vsyncpa %s11, 0
    %13 = vsyncpa [#allocation6], 0
    %s14 = scalar_lea.sflag [#allocation6], 1
    %15 = vsyncpa %s14, 0
    %16 = vsyncpa [#allocation4], 0
    %s17 = scalar_lea.sflag [#allocation4], 1
    %18 = vsyncpa %s17, 0
    %19 = vsyncpa [#allocation9], 0
    %s20 = scalar_lea.sflag [#allocation9], 1
    %21 = vsyncpa %s20, 0
    loop: start=0, step=1, limit=4
    $region2: #{tpu_custom_call.1} parent=1 // loop_pre_header
      _
    $region3: #{tpu_custom_call.1} parent=1 // loop_header
      %s23 = sphi 0, %s27
      %p24 = scmp.ge.s32.totalorder %s23, 4
      %s30 = sphi 0, %s42
      %s31 = sphi 0, %s38
      %s32 = sphi 0, %s30
      %s33 = sphi 0, %s31
      %s34 = sphi 0, %s32
      %s35 = sphi 0, %s33
      %s47 = sphi 0, %s49
      %s50 = sphi 0, %s47
      %s51 = sphi 0, %s50
      %s67 = sphi 0, %s51
      %s75 = sphi 0, %s77
      %s78 = sphi 0, %s75
      %s79 = sphi 0, %s78
      %s95 = sphi 0, %s79
      %s103 = sphi 0, %s105
      %s106 = sphi 0, %s103
      %s107 = sphi 0, %s106
      %s123 = sphi 0, %s107
      %s131 = sphi 0, %s133
      %s134 = sphi 0, %s131
      %s135 = sphi 0, %s134
      %s151 = sphi 0, %s135
      %s159 = sphi 0, %s161
      %s162 = sphi 0, %s159
      %s163 = sphi 0, %s162
      %s179 = sphi 0, %s163
    $region4: #{tpu_custom_call.1} parent=1 // loop_header_branch
      %26 = sbr.rel (%p24) target = $region8
    $region5: #{tpu_custom_call.1} parent=1 // loop_body
      %s28 = ssub.s32 %s23, 1
      %s29 = ssub.s32 %s23, 2
      %s36 = sadd.s32 1, %s31
      %p37 = scmp.ge.s32.totalorder %s36, 1
      %s38 = scalar_select %p37, 0, %s36
      %s39 = sadd.s32 1, %s30
      %s40 = scalar_select %p37, %s39, %s30
      %p41 = scmp.ge.s32.totalorder %s40, 2
      %s42 = scalar_select %p41, 0, %s40
      %s43 = ssub.s32 %s30, %s42
      %s44 = ssub.s32 %s31, %s38
      %s45 = sor.u32 %s43, %s44
      %p46 = scmp.eq.s32.totalorder %s45, 0
      %s48 = sadd.s32 %s47, 1
      %s49 = scalar_select %p46, %s47, %s48
      %p52 = pneg %p46
      %p53 = scmp.eq.s32.totalorder %s23, 1
      %p54 = por %p52, %p53
      %p55 = scmp.ne.s32.totalorder %s47, %s50
      %p56 = scmp.eq.s32.totalorder %s23, 0
      %p57 = por %p55, %p56
      %p58 = scmp.ne.s32.totalorder %s47, %s50
      %p59 = scmp.eq.s32.totalorder %s28, 1
      %p60 = por %p58, %p59
      %p61 = scmp.ne.s32.totalorder %s50, %s51
      %p62 = scmp.eq.s32.totalorder %s28, 0
      %p63 = por %p61, %p62
      %p64 = scmp.ne.s32.totalorder %s50, %s51
      %p65 = scmp.eq.s32.totalorder %s29, 1
      %p66 = por %p64, %p65
      %p68 = scmp.ne.s32.totalorder %s51, %s67
      %p69 = scmp.eq.s32.totalorder %s29, 0
      %p70 = por %p68, %p69
      %s71 = ssub.s32 %s30, %s42
      %s72 = ssub.s32 %s31, %s38
      %s73 = sor.u32 %s71, %s72
      %p74 = scmp.eq.s32.totalorder %s73, 0
      %s76 = sadd.s32 %s75, 1
      %s77 = scalar_select %p74, %s75, %s76
      %p80 = pneg %p74
      %p81 = scmp.eq.s32.totalorder %s23, 1
      %p82 = por %p80, %p81
      %p83 = scmp.ne.s32.totalorder %s75, %s78
      %p84 = scmp.eq.s32.totalorder %s23, 0
      %p85 = por %p83, %p84
      %p86 = scmp.ne.s32.totalorder %s75, %s78
      %p87 = scmp.eq.s32.totalorder %s28, 1
      %p88 = por %p86, %p87
      %p89 = scmp.ne.s32.totalorder %s78, %s79
      %p90 = scmp.eq.s32.totalorder %s28, 0
      %p91 = por %p89, %p90
      %p92 = scmp.ne.s32.totalorder %s78, %s79
      %p93 = scmp.eq.s32.totalorder %s29, 1
      %p94 = por %p92, %p93
      %p96 = scmp.ne.s32.totalorder %s79, %s95
      %p97 = scmp.eq.s32.totalorder %s29, 0
      %p98 = por %p96, %p97
      %s99 = ssub.s32 %s30, %s42
      %s100 = ssub.s32 %s31, %s38
      %s101 = sor.u32 %s99, %s100
      %p102 = scmp.eq.s32.totalorder %s101, 0
      %s104 = sadd.s32 %s103, 1
      %s105 = scalar_select %p102, %s103, %s104
      %p108 = pneg %p102
      %p109 = scmp.eq.s32.totalorder %s23, 1
      %p110 = por %p108, %p109
      %p111 = scmp.ne.s32.totalorder %s103, %s106
      %p112 = scmp.eq.s32.totalorder %s23, 0
      %p113 = por %p111, %p112
      %p114 = scmp.ne.s32.totalorder %s103, %s106
      %p115 = scmp.eq.s32.totalorder %s28, 1
      %p116 = por %p114, %p115
      %p117 = scmp.ne.s32.totalorder %s106, %s107
      %p118 = scmp.eq.s32.totalorder %s28, 0
      %p119 = por %p117, %p118
      %p120 = scmp.ne.s32.totalorder %s106, %s107
      %p121 = scmp.eq.s32.totalorder %s29, 1
      %p122 = por %p120, %p121
      %p124 = scmp.ne.s32.totalorder %s107, %s123
      %p125 = scmp.eq.s32.totalorder %s29, 0
      %p126 = por %p124, %p125
      %s127 = ssub.s32 %s30, %s42
      %s128 = ssub.s32 %s31, %s38
      %s129 = sor.u32 %s127, %s128
      %p130 = scmp.eq.s32.totalorder %s129, 0
      %s132 = sadd.s32 %s131, 1
      %s133 = scalar_select %p130, %s131, %s132
      %p136 = pneg %p130
      %p137 = scmp.eq.s32.totalorder %s23, 1
      %p138 = por %p136, %p137
      %p139 = scmp.ne.s32.totalorder %s131, %s134
      %p140 = scmp.eq.s32.totalorder %s23, 0
      %p141 = por %p139, %p140
      %p142 = scmp.ne.s32.totalorder %s131, %s134
      %p143 = scmp.eq.s32.totalorder %s28, 1
      %p144 = por %p142, %p143
      %p145 = scmp.ne.s32.totalorder %s134, %s135
      %p146 = scmp.eq.s32.totalorder %s28, 0
      %p147 = por %p145, %p146
      %p148 = scmp.ne.s32.totalorder %s134, %s135
      %p149 = scmp.eq.s32.totalorder %s29, 1
      %p150 = por %p148, %p149
      %p152 = scmp.ne.s32.totalorder %s135, %s151
      %p153 = scmp.eq.s32.totalorder %s29, 0
      %p154 = por %p152, %p153
      %s155 = ssub.s32 %s30, %s42
      %s156 = ssub.s32 %s31, %s38
      %s157 = sor.u32 %s155, %s156
      %p158 = scmp.eq.s32.totalorder %s157, 0
      %s160 = sadd.s32 %s159, 1
      %s161 = scalar_select %p158, %s159, %s160
      %p164 = pneg %p158
      %p165 = scmp.eq.s32.totalorder %s23, 1
      %p166 = por %p164, %p165
      %p167 = scmp.ne.s32.totalorder %s159, %s162
      %p168 = scmp.eq.s32.totalorder %s23, 0
      %p169 = por %p167, %p168
      %p170 = scmp.ne.s32.totalorder %s159, %s162
      %p171 = scmp.eq.s32.totalorder %s28, 1
      %p172 = por %p170, %p171
      %p173 = scmp.ne.s32.totalorder %s162, %s163
      %p174 = scmp.eq.s32.totalorder %s28, 0
      %p175 = por %p173, %p174
      %p176 = scmp.ne.s32.totalorder %s162, %s163
      %p177 = scmp.eq.s32.totalorder %s29, 1
      %p178 = por %p176, %p177
      %p180 = scmp.ne.s32.totalorder %s163, %s179
      %p181 = scmp.eq.s32.totalorder %s29, 0
      %p182 = por %p180, %p181
      %p183 = scmp.le.s32.totalorder 1, %s23
      %p184 = scmp.lt.s32.totalorder %s23, 3
      %p185 = pnand %p183, %p184
      %p186 = pneg %p185
      // Predicated region
      $region9: #{tpu_custom_call.1} parent=5 // pred_check
        _
      $region10: #{tpu_custom_call.1} parent=5 // pred_check_branch
        %188 = sbr.rel (%p185) target = $region12
      $region11: #{tpu_custom_call.1} parent=5 // pred_region
        %s189 = ssub.s32 %s23, 1
      $region12: #{tpu_custom_call.1} parent=5 // pred_fallthru
        _
      %p190 = scmp.lt.s32.totalorder %s23, 2
      // Predicated region
      $region13: #{tpu_custom_call.1} parent=5 // pred_check
        %p191 = pneg %p190
      $region14: #{tpu_custom_call.1} parent=5 // pred_check_branch
        %193 = sbr.rel (%p191) target = $region16
      $region15: #{tpu_custom_call.1} parent=5 // pred_region
        // Predicated region
        $region17: #{tpu_custom_call.1} parent=15 // pred_check
          %p194 = pneg %p57
        $region18: #{tpu_custom_call.1} parent=15 // pred_check_branch
          %196 = sbr.rel (%p194) target = $region20
        $region19: #{tpu_custom_call.1} parent=15 // pred_region
          %s197 = sand.u32 %s47, 1
          %s198 = scalar_lea.sflag [#allocation3], %s197
          %s199 = sand.u32 %s47, 1
          %s200 = smul.addr %s199, 8
          %s201 = scalar_lea.vmem [#allocation2], %s200
          %s203 = ssub.s32 128, 128
          %204 = vsyncadd %s198, %s203
          %s205 = sadd.s32 %s31, %s30
          %s206 = smul.addr %s205, 128
          %s207 = scalar_lea.hbm %s0, %s206
          %s209 = sshll.u32 %s201, 4
          %s210 = int_to_ptr.vmem [resolvable:$true] %s209
          %212 = dma.hbm_to_vmem [thread:$0]  %s207, 128, %s210, %s198
        $region20: #{tpu_custom_call.1} parent=15 // pred_fallthru
          _
        // Predicated region
        $region21: #{tpu_custom_call.1} parent=15 // pred_check
          %p213 = pneg %p85
        $region22: #{tpu_custom_call.1} parent=15 // pred_check_branch
          %215 = sbr.rel (%p213) target = $region24
        $region23: #{tpu_custom_call.1} parent=15 // pred_region
          %s216 = sand.u32 %s75, 1
          %s217 = scalar_lea.sflag [#allocation6], %s216
          %s218 = sand.u32 %s75, 1
          %s219 = smul.addr %s218, 4
          %s220 = scalar_lea.vmem [#allocation5], %s219
          %s222 = ssub.s32 64, 64
          %223 = vsyncadd %s217, %s222
          %s224 = sadd.s32 %s31, %s30
          %s225 = smul.addr %s224, 64
          %s226 = scalar_lea.hbm %s1, %s225
          %s228 = sshll.u32 %s220, 4
          %s229 = int_to_ptr.vmem [resolvable:$true] %s228
          %231 = dma.hbm_to_vmem [thread:$0]  %s226, 64, %s229, %s217
        $region24: #{tpu_custom_call.1} parent=15 // pred_fallthru
          _
      $region16: #{tpu_custom_call.1} parent=5 // pred_fallthru
        _
      %p232 = scmp.le.s32.totalorder 1, %s23
      %p233 = scmp.lt.s32.totalorder %s23, 3
      %p234 = pnand %p232, %p233
      %p235 = pneg %p234
      // Predicated region
      $region25: #{tpu_custom_call.1} parent=5 // pred_check
        _
      $region26: #{tpu_custom_call.1} parent=5 // pred_check_branch
        %237 = sbr.rel (%p234) target = $region28
      $region27: #{tpu_custom_call.1} parent=5 // pred_region
        %s238 = ssub.s32 %s23, 1
        %s239 = sand.u32 %s50, 1
        %s240 = scalar_lea.sflag [#allocation3], %s239
        %s241 = sand.u32 %s50, 1
        %s242 = smul.addr %s241, 8
        %s243 = scalar_lea.vmem [#allocation2], %s242
        // Predicated region
        $region29: #{tpu_custom_call.1} parent=27 // pred_check
          %p244 = pneg %p63
        $region30: #{tpu_custom_call.1} parent=27 // pred_check_branch
          %246 = sbr.rel (%p244) target = $region32
        $region31: #{tpu_custom_call.1} parent=27 // pred_region
          %247 = dma.done %s240, 128
        $region32: #{tpu_custom_call.1} parent=27 // pred_fallthru
          _
        %s248 = sand.u32 %s78, 1
        %s249 = scalar_lea.sflag [#allocation6], %s248
        %s250 = sand.u32 %s78, 1
        %s251 = smul.addr %s250, 4
        %s252 = scalar_lea.vmem [#allocation5], %s251
        // Predicated region
        $region33: #{tpu_custom_call.1} parent=27 // pred_check
          %p253 = pneg %p91
        $region34: #{tpu_custom_call.1} parent=27 // pred_check_branch
          %255 = sbr.rel (%p253) target = $region36
        $region35: #{tpu_custom_call.1} parent=27 // pred_region
          %256 = dma.done %s249, 64
        $region36: #{tpu_custom_call.1} parent=27 // pred_fallthru
          _
        %s257 = sand.u32 %s50, 1
        %s258 = scalar_lea.sflag [#allocation3], %s257
        %s259 = sand.u32 %s50, 1
        %s260 = smul.addr %s259, 8
        %s261 = scalar_lea.vmem [#allocation2], %s260
        %p262 = pneg %p63
        %p263 = pneg %p60
        %s264 = sand.u32 %s78, 1
        %s265 = scalar_lea.sflag [#allocation6], %s264
        %s266 = sand.u32 %s78, 1
        %s267 = smul.addr %s266, 4
        %s268 = scalar_lea.vmem [#allocation5], %s267
        %p269 = pneg %p91
        %p270 = pneg %p88
        %p271 = pneg %p119
        %p272 = pneg %p116
        %s273 = sand.u32 %s106, 1
        %s274 = scalar_lea.sflag [#allocation4], %s273
        %s275 = sand.u32 %s106, 1
        %s276 = scalar_lea.vmem [#allocation7], %s275
        %p277 = pneg %p147
        %p278 = pneg %p144
        %s279 = sand.u32 %s28, 1
        %s280 = scalar_lea.sflag [#allocation9], %s279
        %s281 = sand.u32 %s134, 1
        %s282 = scalar_lea.vmem [#allocation8], %s281
        %p283 = pneg %p175
        %p284 = pneg %p172
        %s285 = sand.u32 %s28, 1
        %s286 = scalar_lea.sflag [#allocation9], %s285
        %s287 = sand.u32 %s162, 1
        %s288 = scalar_lea.vmem [#allocation10], %s287
        %v289 = vld [vmem:[%s243] sm:$0xff]
        %v290 = vld [vmem:[%s252] sm:$0xf]
        %v291 = vunpack.c.l.bf16 %v290
        %v292 = vand.u32 2147483647, %v289
        %v293 = vsub.f32 0.0, %v292
        %v294 = vmul.f32 %v293, 1.442695
        %v295 = vpow.pop %v294
        %v296 = vadd.f32 %v295, 1.0
        %v297 = vlog2.pop %v296
        %v298 = vmul.f32 %v297, 0.6931472
        %v299 = vmin.f32 %v289, 0.0
        %v300 = vsub.f32 %v299, %v298
        %v301 = vmax.f32 %v300, -100.0
        %v302 = vmax.f32 %v289, 0.0
        %v303 = vsub.f32 0.0, %v302
        %v304 = vsub.f32 %v303, %v298
        %v305 = vmax.f32 %v304, -100.0
        %v306 = vsub.f32 0.0, %v305
        %v307 = vsub.f32 %v301, %v305
        %v308 = vmul.f32 %v291, %v307
        %v309 = vsub.f32 %v306, %v308
        %v310 = vrot.slane %v309, 4
        %v311 = vadd.f32 %v309, %v310
        %v312 = vrot.slane %v311, 2
        %v313 = vadd.f32 %v311, %v312
        %v314 = vrot.slane %v313, 1
        %v315 = vadd.f32 %v313, %v314
        %vm316 = vcmp.ge.f32.partialorder %v289, 0.0
        %v317 = vsel %vm316, 1.0, %v295
        %v318 = vrcp.pop %v296
        %v319 = vmul.f32 %v317, %v318
        %v320 = vmul.f32 %v319, %v291
        %v321 = vrot.slane %v320, 4
        %v322 = vadd.f32 %v320, %v321
        %v323 = vrot.slane %v322, 2
        %v324 = vadd.f32 %v322, %v323
        %v325 = vrot.slane %v324, 1
        %v326 = vadd.f32 %v324, %v325
        %v327 = vadd.f32 %v319, %v291
        %v328 = vrot.slane %v327, 4
        %v329 = vadd.f32 %v327, %v328
        %v330 = vrot.slane %v329, 2
        %v331 = vadd.f32 %v329, %v330
        %v332 = vrot.slane %v331, 1
        %v333 = vadd.f32 %v331, %v332
        %334 = vst [vmem:[%s276] sm:$0x1] %v315
        %335 = vst [vmem:[%s282] sm:$0x1] %v326
        %336 = vst [vmem:[%s288] sm:$0x1] %v333
        %s337 = sand.u32 %s106, 1
        %s338 = scalar_lea.sflag [#allocation4], %s337
        %s339 = sand.u32 %s106, 1
        %s340 = scalar_lea.vmem [#allocation7], %s339
        %s341 = sand.u32 %s28, 1
        %s342 = scalar_lea.sflag [#allocation9], %s341
        %s343 = sand.u32 %s134, 1
        %s344 = scalar_lea.vmem [#allocation8], %s343
        %s345 = sand.u32 %s28, 1
        %s346 = scalar_lea.sflag [#allocation9], %s345
        %s347 = sand.u32 %s162, 1
        %s348 = scalar_lea.vmem [#allocation10], %s347
        // Predicated region
        $region37: #{tpu_custom_call.1} parent=27 // pred_check
          %p349 = pneg %p116
        $region38: #{tpu_custom_call.1} parent=27 // pred_check_branch
          %351 = sbr.rel (%p349) target = $region40
        $region39: #{tpu_custom_call.1} parent=27 // pred_region
          %s353 = ssub.s32 16, 16
          %354 = vsyncadd %s338, %s353
          %s355 = sadd.s32 %s33, %s32
          %s356 = smul.addr %s355, 16
          %s357 = scalar_lea.hbm %s2, %s356
          %s359 = sshll.u32 %s340, 4
          %s360 = int_to_ptr.vmem [resolvable:$true] %s359
          %362 = dma.vmem_to_hbm [thread:$0]  %s360, 16, %s357, %s338
        $region40: #{tpu_custom_call.1} parent=27 // pred_fallthru
          _
        // Predicated region
        $region41: #{tpu_custom_call.1} parent=27 // pred_check
          %p363 = pneg %p144
        $region42: #{tpu_custom_call.1} parent=27 // pred_check_branch
          %365 = sbr.rel (%p363) target = $region44
        $region43: #{tpu_custom_call.1} parent=27 // pred_region
          %s367 = ssub.s32 16, 16
          %368 = vsyncadd %s342, %s367
          %s369 = sadd.s32 %s33, %s32
          %s370 = smul.addr %s369, 16
          %s371 = scalar_lea.hbm %s3, %s370
          %s373 = sshll.u32 %s344, 4
          %s374 = int_to_ptr.vmem [resolvable:$true] %s373
          %376 = dma.vmem_to_hbm [thread:$0]  %s374, 16, %s371, %s342
        $region44: #{tpu_custom_call.1} parent=27 // pred_fallthru
          _
        // Predicated region
        $region45: #{tpu_custom_call.1} parent=27 // pred_check
          %p377 = pneg %p172
        $region46: #{tpu_custom_call.1} parent=27 // pred_check_branch
          %379 = sbr.rel (%p377) target = $region48
        $region47: #{tpu_custom_call.1} parent=27 // pred_region
          %s381 = ssub.s32 16, 16
          %382 = vsyncadd %s346, %s381
          %s383 = sadd.s32 %s33, %s32
          %s384 = smul.addr %s383, 16
          %s385 = scalar_lea.hbm %s4, %s384
          %s387 = sshll.u32 %s348, 4
          %s388 = int_to_ptr.vmem [resolvable:$true] %s387
          %390 = dma.vmem_to_hbm [thread:$0]  %s388, 16, %s385, %s346
        $region48: #{tpu_custom_call.1} parent=27 // pred_fallthru
          _
      $region28: #{tpu_custom_call.1} parent=5 // pred_fallthru
        _
      %p391 = scmp.le.s32.totalorder 2, %s23
      // Predicated region
      $region49: #{tpu_custom_call.1} parent=5 // pred_check
        %p392 = pneg %p391
      $region50: #{tpu_custom_call.1} parent=5 // pred_check_branch
        %394 = sbr.rel (%p392) target = $region52
      $region51: #{tpu_custom_call.1} parent=5 // pred_region
        %s395 = ssub.s32 %s23, 2
        // Predicated region
        $region53: #{tpu_custom_call.1} parent=51 // pred_check
          %p396 = pneg %p122
        $region54: #{tpu_custom_call.1} parent=51 // pred_check_branch
          %398 = sbr.rel (%p396) target = $region56
        $region55: #{tpu_custom_call.1} parent=51 // pred_region
          %s399 = sand.u32 %s107, 1
          %s400 = scalar_lea.sflag [#allocation4], %s399
          %s401 = sand.u32 %s107, 1
          %s402 = scalar_lea.vmem [#allocation7], %s401
          %403 = dma.done %s400, 16
        $region56: #{tpu_custom_call.1} parent=51 // pred_fallthru
          _
        // Predicated region
        $region57: #{tpu_custom_call.1} parent=51 // pred_check
          %p404 = pneg %p150
        $region58: #{tpu_custom_call.1} parent=51 // pred_check_branch
          %406 = sbr.rel (%p404) target = $region60
        $region59: #{tpu_custom_call.1} parent=51 // pred_region
          %s407 = sand.u32 %s29, 1
          %s408 = scalar_lea.sflag [#allocation9], %s407
          %s409 = sand.u32 %s135, 1
          %s410 = scalar_lea.vmem [#allocation8], %s409
          %411 = dma.done %s408, 16
        $region60: #{tpu_custom_call.1} parent=51 // pred_fallthru
          _
        // Predicated region
        $region61: #{tpu_custom_call.1} parent=51 // pred_check
          %p412 = pneg %p178
        $region62: #{tpu_custom_call.1} parent=51 // pred_check_branch
          %414 = sbr.rel (%p412) target = $region64
        $region63: #{tpu_custom_call.1} parent=51 // pred_region
          %s415 = sand.u32 %s29, 1
          %s416 = scalar_lea.sflag [#allocation9], %s415
          %s417 = sand.u32 %s163, 1
          %s418 = scalar_lea.vmem [#allocation10], %s417
          %419 = dma.done %s416, 16
        $region64: #{tpu_custom_call.1} parent=51 // pred_fallthru
          _
      $region52: #{tpu_custom_call.1} parent=5 // pred_fallthru
        _
    $region6: #{tpu_custom_call.1} parent=1 // loop_footer
      %s27 = sadd.s32 1, %s23
    $region7: #{tpu_custom_call.1} parent=1 // loop_footer_branch
      %22 = sbr.rel target = $region3
    $region8: #{tpu_custom_call.1} parent=1 // loop_exit
      _
    %420 = vsyncpa [#allocation3], 1
    %s421 = scalar_lea.sflag [#allocation3], 1
    %422 = vsyncpa %s421, 1
    %423 = vsyncpa [#allocation6], 1
    %s424 = scalar_lea.sflag [#allocation6], 1
    %425 = vsyncpa %s424, 1
    %426 = vsyncpa [#allocation4], 1
    %s427 = scalar_lea.sflag [#allocation4], 1
    %428 = vsyncpa %s427, 1
    %429 = vsyncpa [#allocation9], 1
    %s430 = scalar_lea.sflag [#allocation9], 1
    %431 = vsyncpa %s430, 1

</llo_original>
